<compile_context>
chip_gen: v7x
topology: tpu7x:2x2x1
jax: 0.10.0
libtpu: 0.0.40
codegen_flags: <defaults>
</compile_context>

<pallas_src>
import math

import jax
import jax.numpy as jnp
from jax import lax
from jax.experimental import pallas as pl
from jax.experimental.pallas import tpu as pltpu

LANE = 128                     # lane width (last dim of every tile)
SUB = 8                        # sublanes per vreg
CHUNK = 64                     # rows folded per inner-loop step (8 f32 vregs/input)
TILE_BYTES = 2 * 1024 * 1024   # ~2 MiB of HBM traffic per input per grid step


def _num_tensorcores() -> int:
    """Best-effort TensorCores-per-chip visible to one pallas_call (2 on v7x)."""
    n = 1
    try:
        kind = jax.devices()[0].device_kind.lower()
        if "v7" in kind:
            n = 2
    except Exception:
        pass
    try:
        info = pltpu.get_tpu_info()
        for name in ("tensorcores_per_chip", "num_tensorcores", "tensorcore_count"):
            v = getattr(info, name, None)
            if isinstance(v, int) and v >= 1:
                n = max(n, v)
                break
    except Exception:
        pass
    return min(n, 2)


def _make_kernel(tm: int, rows_valid: int, bpc: int, two_axes: bool,
                 mask_needed: bool):
    """Kernel with static tile height / valid-row count / per-core block count."""
    n_chunks, rem = divmod(tm, CHUNK)

    def kernel(yhat_ref, y_ref, out_ref):
        if two_axes:
            c = pl.program_id(0)              # core-parallel axis (v7x)
            i = pl.program_id(1)              # sequential reduction axis
            gb = c * bpc + i                  # global (un-clamped) row-block index
        else:
            i = pl.program_id(0)
            gb = i

        @pl.when(i == 0)
        def _():
            out_ref[...] = jnp.zeros_like(out_ref)

        def add_tile(masked: bool):
            row0 = gb * tm                    # first global row of this tile

            def chunk_sq(r0, ch):
                a = yhat_ref[pl.ds(r0, ch), :].astype(jnp.float32)
                b = y_ref[pl.ds(r0, ch), :].astype(jnp.float32)
                d = a - b
                dd = d * d
                if masked:
                    r = lax.broadcasted_iota(jnp.int32, (ch, LANE), 0)
                    dd = jnp.where(row0 + r0 + r < rows_valid, dd, 0.0)
                return dd

            if n_chunks > 0:
                def body(ci, acc):
                    r0 = pl.multiple_of(ci * CHUNK, CHUNK)
                    dd = chunk_sq(r0, CHUNK)
                    # pure VPU adds: fold 64 rows onto the vreg-shaped carry
                    return acc + dd.reshape(CHUNK // SUB, SUB, LANE).sum(axis=0)

                acc = lax.fori_loop(0, n_chunks, body,
                                    jnp.zeros((SUB, LANE), jnp.float32),
                                    unroll=2)
                out_ref[...] += acc

            if rem > 0:
                dd = chunk_sq(n_chunks * CHUNK, rem)
                if rem % SUB == 0:
                    out_ref[...] += dd.reshape(rem // SUB, SUB, LANE).sum(axis=0)
                else:
                    # tiny irregular tail inside the tile (small inputs only)
                    out_ref[0:1, :] += dd.sum(axis=0, keepdims=True)

        if mask_needed:
            # Boundary tile (rows beyond rows_valid) or clamped duplicate tile
            # takes the masked path; every other tile runs mask-free.
            partial_tile = (gb + 1) * tm > rows_valid

            @pl.when(jnp.logical_not(partial_tile))
            def _():
                add_tile(masked=False)

            @pl.when(partial_tile)
            def _():
                add_tile(masked=True)
        else:
            add_tile(masked=False)

    return kernel


def _sumsq_pallas(yhat2d: jax.Array, y2d: jax.Array) -> jax.Array:
    """Sum of squared differences of two (rows, 128) lane-dense slabs."""
    rows = yhat2d.shape[0]
    itemsize = max(yhat2d.dtype.itemsize, y2d.dtype.itemsize)
    # ~2 MiB per input per step (4096 rows f32, 8192 rows bf16), CHUNK-aligned.
    tm_max = max(CHUNK, (TILE_BYTES // (LANE * itemsize)) // CHUNK * CHUNK)
    tm = rows if rows <= tm_max else tm_max   # block == full array for small n
    nb = -(-rows // tm)                       # total row-blocks

    cost = pl.CostEstimate(
        flops=3 * rows * LANE,
        transcendentals=0,
        bytes_accessed=rows * LANE * (yhat2d.dtype.itemsize + y2d.dtype.itemsize),
    )

    def call(nc: int) -> jax.Array:
        two_axes = nc > 1
        mask_last = nb * tm > rows
        if two_axes:
            bpc = -(-nb // nc)                # row-blocks per core
            has_dup = nc * bpc > nb           # clamped duplicate tiles exist
            grid = (nc, bpc)
            # Clamp so no fully out-of-bounds DMA is issued; the kernel masks
            # the logically out-of-range rows to zero regardless.
            in_map = lambda c, i: (jnp.minimum(c * bpc + i, nb - 1), 0)
            out_map = lambda c, i: (c, 0)
            out_rows = nc * SUB
            core_sem = getattr(pltpu, "CORE_PARALLEL", "parallel")
            dim_sem = (core_sem, "arbitrary")
        else:
            bpc = nb
            has_dup = False
            grid = (nb,)
            in_map = lambda i: (i, 0)
            out_map = lambda i: (0, 0)
            out_rows = SUB
            dim_sem = ("arbitrary",)

        kernel = _make_kernel(tm, rows, bpc, two_axes, mask_last or has_dup)

        partial = pl.pallas_call(
            kernel,
            out_shape=jax.ShapeDtypeStruct((out_rows, LANE), jnp.float32),
            grid_spec=pltpu.PrefetchScalarGridSpec(
                num_scalar_prefetch=0,
                grid=grid,
                in_specs=[pl.BlockSpec((tm, LANE), in_map),
                          pl.BlockSpec((tm, LANE), in_map)],
                out_specs=pl.BlockSpec((SUB, LANE), out_map),
            ),
            compiler_params=pltpu.CompilerParams(dimension_semantics=dim_sem),
            cost_estimate=cost,
        )(yhat2d, y2d)
        # final tiny (out_rows*128-element) reduction outside the kernel
        return partial.sum()

    nc = 2 if (_num_tensorcores() >= 2 and nb >= 2) else 1
    if nc == 1:
        return call(1)
    try:
        return call(nc)
    except Exception:
        # Core-split path not supported on this chip/runtime: single-axis fallback.
        return call(1)


def rmse_loss(yhat: jax.Array, y: jax.Array) -> jax.Array:
    assert yhat.shape == y.shape, "yhat and y must have the same shape"
    n = math.prod(yhat.shape)
    assert n > 0, "RMSE of an empty tensor is undefined"

    yf = yhat.reshape(-1)
    tf = y.reshape(-1)
    n_main = (n // LANE) * LANE

    total = jnp.zeros((), jnp.float32)
    if n_main > 0:
        rows = n_main // LANE
        ym = (yf if n_main == n else yf[:n_main]).reshape(rows, LANE)
        tm2 = (tf if n_main == n else tf[:n_main]).reshape(rows, LANE)
        total = total + _sumsq_pallas(ym, tm2)
    if n_main < n:
        # <128-element ragged tail handled in plain JAX (avoids padding and
        # copying both full arrays through HBM).
        dt = yf[n_main:].astype(jnp.float32) - tf[n_main:].astype(jnp.float32)
        total = total + jnp.sum(dt * dt)

    inv_n = 1.0 / float(n)   # Python-float reciprocal: exact for n > 2^24 too
    return jnp.sqrt(total * inv_n)


if __name__ == "__main__":
    key = jax.random.PRNGKey(0)
    k1, k2 = jax.random.split(key)

    # Small NCHW-like inputs (the loss is shape-agnostic; it reduces over all elems).
    shape = (2, 4, 16, 16)
    yhat = jax.random.normal(k1, shape, dtype=jnp.float32)
    y = jax.random.normal(k2, shape, dtype=jnp.float32)

    loss = rmse_loss(yhat, y)
    jax.block_until_ready(loss)

    # reference check (plain JAX)
    ref = jnp.sqrt(jnp.mean((yhat - y) ** 2))
    assert jnp.allclose(loss, ref, rtol=1e-5, atol=1e-6), (loss, ref)

    print("KERNEL_OK")
</pallas_src>

<mosaic_0001>
module attributes {stable_mosaic.version = 11 : i64} {
  func.func @kernel(%arg0: i32, %arg1: memref<16x128xf32, #tpu.memory_space<vmem>>, %arg2: memref<16x128xf32, #tpu.memory_space<vmem>>, %arg3: memref<8x128xf32, #tpu.memory_space<vmem>>) attributes {dimension_semantics = [#tpu.dimension_semantics<arbitrary>], iteration_bounds = array<i64: 1>, scalar_prefetch = 0 : i64, scratch_operands = 0 : i64, tpu.core_type = #tpu.core_type<tc>, window_params = [{transform_indices = @transform_0, window_bounds = array<i64: 16, 128>}, {transform_indices = @transform_1, window_bounds = array<i64: 16, 128>}, {pipeline_mode = #tpu.pipeline_mode<synchronous>, transform_indices = @transform_2, window_bounds = array<i64: 8, 128>}]} {
    %c0_i32 = arith.constant 0 : i32
    %0 = arith.cmpi eq, %arg0, %c0_i32 : i32
    %1 = arith.extui %0 : i1 to i32
    %c0_i32_0 = arith.constant 0 : i32
    %2 = arith.cmpi ne, %1, %c0_i32_0 : i32
    scf.if %2 {
      %cst_8 = arith.constant 0.000000e+00 : f32
      %12 = vector.broadcast %cst_8 : f32 to vector<8x128xf32>
      %c0_9 = arith.constant 0 : index
      %c0_10 = arith.constant 0 : index
      %13 = vector.load %arg3[%c0_9, %c0_10] : memref<8x128xf32, #tpu.memory_space<vmem>>, vector<8x128xf32>
      tpu.vector_store %arg3[%c0_9, %c0_10], %12 {strides = array<i32>} : memref<8x128xf32, #tpu.memory_space<vmem>>, vector<8x128xf32>,
    } else {
    }
    %c0 = arith.constant 0 : index
    %c0_1 = arith.constant 0 : index
    %3 = vector.load %arg1[%c0, %c0_1] : memref<16x128xf32, #tpu.memory_space<vmem>>, vector<16x128xf32>
    %c0_2 = arith.constant 0 : index
    %c0_3 = arith.constant 0 : index
    %4 = vector.load %arg2[%c0_2, %c0_3] : memref<16x128xf32, #tpu.memory_space<vmem>>, vector<16x128xf32>
    %5 = arith.subf %3, %4 : vector<16x128xf32>
    %6 = arith.mulf %5, %5 : vector<16x128xf32>
    %c0_4 = arith.constant 0 : index
    %c0_5 = arith.constant 0 : index
    %7 = vector.load %arg3[%c0_4, %c0_5] : memref<8x128xf32, #tpu.memory_space<vmem>>, vector<8x128xf32>
    %8 = vector.shape_cast %6 : vector<16x128xf32> to vector<2x8x128xf32>
    %cst = arith.constant dense<0.000000e+00> : vector<8x128xf32>
    %9 = vector.multi_reduction <add>, %8, %cst [0] : vector<2x8x128xf32> to vector<8x128xf32>
    %10 = arith.addf %7, %9 : vector<8x128xf32>
    %c0_6 = arith.constant 0 : index
    %c0_7 = arith.constant 0 : index
    %11 = vector.load %arg3[%c0_6, %c0_7] : memref<8x128xf32, #tpu.memory_space<vmem>>, vector<8x128xf32>
    tpu.vector_store %arg3[%c0_6, %c0_7], %10 {strides = array<i32>} : memref<8x128xf32, #tpu.memory_space<vmem>>, vector<8x128xf32>,
    return
  }
  func.func @transform_0(%arg0: i32) -> (i32, i32) {
    %c0_i32 = arith.constant 0 : i32
    %c0_i32_0 = arith.constant 0 : i32
    return %arg0, %c0_i32 : i32, i32
  }
  func.func @transform_1(%arg0: i32) -> (i32, i32) {
    %c0_i32 = arith.constant 0 : i32
    %c0_i32_0 = arith.constant 0 : i32
    return %arg0, %c0_i32 : i32, i32
  }
  func.func @transform_2(%arg0: i32) -> (i32, i32) {
    %c0_i32 = arith.constant 0 : i32
    %c0_i32_0 = arith.constant 0 : i32
    %c0_i32_1 = arith.constant 0 : i32
    return %c0_i32, %c0_i32_0 : i32, i32
  }
}

</mosaic_0001>

<llo_original>
// kernel: tpu_custom_call.1
$region0: #{tpu_custom_call.1}
  #allocation0 [shape = 'u32[]', space=smem, size = 0x4, offset = 0x4, fixed_abs, tag = 'smem constant byte address 0x4 - core index']
  #allocation1 [shape = 'u32[144,128]{1,0:T(1,128)}', space=vmem, size = 0x12000, scoped, tag = 'internal scratch']
  %s0 = inlined_call_operand.hbm [shape: f32[16,128], index: 0, kind: input, shape index: {}]
  %s1 = inlined_call_operand.hbm [shape: f32[16,128], index: 1, kind: input, shape index: {}]
  %s2 = inlined_call_operand.hbm [shape: f32[8,128], index: 2, kind: output, shape index: {}]
  %s3 = sld [smem:[#allocation0]]
  $region30: #{tpu_custom_call.1} parent=0
    _
  %s5 = ssub.s32 1, %s3
  %s6 = scalar_select 0, %s5, %s3
  $region1: #{tpu_custom_call.1} parent=0
    #allocation2 [shape = 'u8[8192]{0}', space=vmem, size = 0x2000, scoped, tag = 'input window, operand 0, single buffered']
    #allocation3 [shape = 's32[1]{0}', space=sflag, size = 0x4, scoped, tag = 'scoped memory for tpu_custom_call.1']
    #allocation4 [shape = 's32[1]{0}', space=sflag, size = 0x4, scoped, tag = 'scoped memory for tpu_custom_call.1']
    #allocation5 [shape = 'u8[8192]{0}', space=vmem, size = 0x2000, scoped, tag = 'input window, operand 1, single buffered']
    #allocation6 [shape = 's32[1]{0}', space=sflag, size = 0x4, scoped, tag = 'scoped memory for tpu_custom_call.1']
    #allocation7 [shape = 'u8[4096]{0}', space=vmem, size = 0x1000, scoped, tag = 'output window, operand 0, single buffered']
    %7 = vsyncpa [#allocation3], 0
    %8 = vsyncpa [#allocation6], 0
    %9 = vsyncpa [#allocation4], 0
    // Predicated region
    $region2: #{tpu_custom_call.1} parent=1 // pred_check
      _
    $region3: #{tpu_custom_call.1} parent=1 // pred_check_branch
      %11 = sbr.rel (0) target = $region5
    $region4: #{tpu_custom_call.1} parent=1 // pred_region
      %s13 = ssub.s32 256, 256
      %14 = vsyncadd [#allocation3], %s13
      %s15 = sshll.u32 [#allocation2], 4
      %s16 = int_to_ptr.vmem [resolvable:$true] %s15
      %21 = dma.hbm_to_vmem [thread:$0]  %s0, 256, %s16, [#allocation3], 128, 128, 8
    $region5: #{tpu_custom_call.1} parent=1 // pred_fallthru
      _
    // Predicated region
    $region6: #{tpu_custom_call.1} parent=1 // pred_check
      _
    $region7: #{tpu_custom_call.1} parent=1 // pred_check_branch
      %23 = sbr.rel (0) target = $region9
    $region8: #{tpu_custom_call.1} parent=1 // pred_region
      %s25 = ssub.s32 256, 256
      %26 = vsyncadd [#allocation6], %s25
      %s27 = sshll.u32 [#allocation5], 4
      %s28 = int_to_ptr.vmem [resolvable:$true] %s27
      %33 = dma.hbm_to_vmem [thread:$0]  %s1, 256, %s28, [#allocation6], 128, 128, 8
    $region9: #{tpu_custom_call.1} parent=1 // pred_fallthru
      _
    // Predicated region
    $region10: #{tpu_custom_call.1} parent=1 // pred_check
      _
    $region11: #{tpu_custom_call.1} parent=1 // pred_check_branch
      %35 = sbr.rel (0) target = $region13
    $region12: #{tpu_custom_call.1} parent=1 // pred_region
      %36 = dma.done [#allocation3], 256
    $region13: #{tpu_custom_call.1} parent=1 // pred_fallthru
      _
    // Predicated region
    $region14: #{tpu_custom_call.1} parent=1 // pred_check
      _
    $region15: #{tpu_custom_call.1} parent=1 // pred_check_branch
      %38 = sbr.rel (0) target = $region17
    $region16: #{tpu_custom_call.1} parent=1 // pred_region
      %39 = dma.done [#allocation6], 256
    $region17: #{tpu_custom_call.1} parent=1 // pred_fallthru
      _
    %p40 = scmp.eq.s32.totalorder 0, 0
    // Predicated region
    $region18: #{tpu_custom_call.1} parent=1 // pred_check
      %p41 = pneg %p40
    $region19: #{tpu_custom_call.1} parent=1 // pred_check_branch
      %43 = sbr.rel (%p41) target = $region21
    $region20: #{tpu_custom_call.1} parent=1 // pred_region
      %44 = vst [vmem:[#allocation7] sm:$0xff] 0.0
    $region21: #{tpu_custom_call.1} parent=1 // pred_fallthru
      _
    %v45 = vld [vmem:[#allocation2] sm:$0xff]
    %v46 = vld [vmem:[#allocation2 + $0x8] sm:$0xff]
    %v47 = vld [vmem:[#allocation5] sm:$0xff]
    %v48 = vld [vmem:[#allocation5 + $0x8] sm:$0xff]
    %v49 = vsub.f32 %v45, %v47
    %v50 = vsub.f32 %v46, %v48
    %v51 = vmul.f32 %v49, %v49
    %v52 = vmul.f32 %v50, %v50
    %v53 = vld [vmem:[#allocation7] sm:$0xff]
    %v54 = vadd.f32 %v51, %v52
    %v55 = vadd.f32 %v53, %v54
    %56 = vst [vmem:[#allocation7] sm:$0xff] %v55
    // Predicated region
    $region22: #{tpu_custom_call.1} parent=1 // pred_check
      _
    $region23: #{tpu_custom_call.1} parent=1 // pred_check_branch
      %58 = sbr.rel (0) target = $region25
    $region24: #{tpu_custom_call.1} parent=1 // pred_region
      %s60 = ssub.s32 128, 128
      %61 = vsyncadd [#allocation4], %s60
      %s63 = sshll.u32 [#allocation7], 4
      %s64 = int_to_ptr.vmem [resolvable:$true] %s63
      %66 = dma.vmem_to_hbm [thread:$0]  %s64, 128, %s2, [#allocation4]
    $region25: #{tpu_custom_call.1} parent=1 // pred_fallthru
      _
    // Predicated region
    $region26: #{tpu_custom_call.1} parent=1 // pred_check
      _
    $region27: #{tpu_custom_call.1} parent=1 // pred_check_branch
      %68 = sbr.rel (0) target = $region29
    $region28: #{tpu_custom_call.1} parent=1 // pred_region
      %69 = dma.done [#allocation4], 128
    $region29: #{tpu_custom_call.1} parent=1 // pred_fallthru
      _
    %70 = vsyncpa [#allocation3], 1
    %71 = vsyncpa [#allocation6], 1
    %72 = vsyncpa [#allocation4], 1

</llo_original>
